<compile_context>
chip_gen: v5e
topology: v5e:2x2
jax: 0.10.0
libtpu: 0.0.40
codegen_flags: <defaults>
</compile_context>

<pallas_src>
import jax
import jax.numpy as jnp
from jax.experimental import pallas as pl
from jax.experimental.pallas import tpu as pltpu

LANE = 128


# ------------------------------ fused kernel --------------------------------
def _cnn_fused_kernel(ids_ref, table_ref, wconv_ref, bconv_ref, mask_ref,
                      wfc_ref, bfc_ref, out_ref, emb_buf, sem):
    """Embedding gather + conv/ReLU/max-pool (all filter sizes) + FC."""
    S, NF = mask_ref.shape                      # seq len, padded feature width
    ntok, E = emb_buf.shape                     # tokens per batch tile, emb dim
    TB = ntok // S                              # batch tile
    KE = wconv_ref.shape[0]                     # fs_max * E
    fs_max = KE // E

    bi = pl.program_id(0)
    base = bi * ntok

    # ---- embedding gather: one HBM->VMEM row DMA per token -----------------
    @pl.loop(0, ntok)
    def _(t):
        row = ids_ref[base + t]                 # dynamic SMEM read (prefetched)
        pltpu.make_async_copy(table_ref.at[row], emb_buf.at[t],
                              sem.at[0]).start()

    @pl.loop(0, ntok)
    def _(t):
        # Same-sized descriptor; waits for one outstanding row copy.
        pltpu.make_async_copy(table_ref.at[0], emb_buf.at[0],
                              sem.at[0]).wait()

    # ---- im2col windows: [TB, S, fs_max*E], zero-padded past end of seq ----
    emb = emb_buf[...].reshape(TB, S, E)
    if fs_max > 1:
        embp = jnp.concatenate(
            [emb, jnp.zeros((TB, fs_max - 1, E), jnp.float32)], axis=1)
    else:
        embp = emb
    win = jnp.concatenate([embp[:, i:i + S, :] for i in range(fs_max)], axis=-1)
    x = win.reshape(TB * S, KE).astype(jnp.bfloat16)

    # ---- conv for ALL filter sizes as one wide MXU matmul + bias + ReLU ----
    acc = jnp.dot(x, wconv_ref[...], preferred_element_type=jnp.float32)
    acc = jnp.maximum(acc + bconv_ref[...], 0.0)            # [TB*S, NF]

    # ---- mask invalid time positions, max-pool over time (sublane reduce) --
    acc = acc.reshape(TB, S, NF) + mask_ref[...][None, :, :]
    pooled = jnp.max(acc, axis=1)                           # [TB, NF]

    # ---- FC on the lane-dense pooled slab -----------------------------------
    # TODO(synk): nn.Dropout treated as identity (inference mode).
    out = jnp.dot(pooled.astype(jnp.bfloat16), wfc_ref[...],
                  preferred_element_type=jnp.float32) + bfc_ref[...]
    out_ref[...] = out


# -------------------------------- wrapper ------------------------------------
def cnn_forward(text, params):
    emb_table = params["embedding"]                         # [V, E] f32
    filter_sizes = params["filter_sizes"]
    conv_w, conv_b = params["conv_w"], params["conv_b"]
    fc_w, fc_b = params["fc_w"], params["fc_b"]

    B, S = text.shape
    V, E = emb_table.shape
    Fn = conv_w[0].shape[0]
    n_groups = len(filter_sizes)
    fs_max = max(filter_sizes)
    KE = fs_max * E
    NF = n_groups * Fn
    NF_pad = ((NF + LANE - 1) // LANE) * LANE               # lane-dense features
    O = fc_w.shape[0]
    O_pad = ((O + LANE - 1) // LANE) * LANE                 # lane-dense output

    # Pack all conv filter banks into one [fs_max*E, NF_pad] bf16 matrix,
    # zero-padding taps beyond each filter's width and unused output columns.
    w_all = jnp.zeros((KE, NF_pad), jnp.float32)
    b_all = jnp.zeros((1, NF_pad), jnp.float32)
    mask = jnp.zeros((S, NF_pad), jnp.float32)              # 0 valid / -1e30 invalid
    for g, (fs, w, b) in enumerate(zip(filter_sizes, conv_w, conv_b)):
        for i in range(fs):
            w_all = w_all.at[i * E:(i + 1) * E, g * Fn:(g + 1) * Fn].set(w[:, i, :].T)
        b_all = b_all.at[0, g * Fn:(g + 1) * Fn].set(b)
        L = S - fs + 1                                      # valid conv length
        mask = mask.at[L:, g * Fn:(g + 1) * Fn].set(-1e30)
    w_all = w_all.astype(jnp.bfloat16)

    # FC weights packed to the padded feature / output widths.
    w_fc = jnp.zeros((NF_pad, O_pad), jnp.float32)
    w_fc = w_fc.at[:NF, :O].set(fc_w.T).astype(jnp.bfloat16)
    b_fc = jnp.zeros((1, O_pad), jnp.float32).at[0, :O].set(fc_b)

    # Batch tiling: full-dim block for small B, otherwise 8-aligned tiles.
    TB = 8 if (B % 8 == 0) else B
    grid = (B // TB,)

    ids = text.reshape(B * S).astype(jnp.int32)

    out_pad = pl.pallas_call(
        _cnn_fused_kernel,
        out_shape=jax.ShapeDtypeStruct((B, O_pad), jnp.float32),
        grid_spec=pltpu.PrefetchScalarGridSpec(
            num_scalar_prefetch=1,
            grid=grid,
            in_specs=[
                pl.BlockSpec(memory_space=pl.ANY),                     # emb table (HBM)
                pl.BlockSpec((KE, NF_pad), lambda i, ids: (0, 0)),     # packed conv W
                pl.BlockSpec((1, NF_pad), lambda i, ids: (0, 0)),      # packed conv b
                pl.BlockSpec((S, NF_pad), lambda i, ids: (0, 0)),      # time-valid mask
                pl.BlockSpec((NF_pad, O_pad), lambda i, ids: (0, 0)),  # packed fc W
                pl.BlockSpec((1, O_pad), lambda i, ids: (0, 0)),       # packed fc b
            ],
            out_specs=pl.BlockSpec((TB, O_pad), lambda i, ids: (i, 0)),
            scratch_shapes=[
                pltpu.VMEM((TB * S, E), jnp.float32),                  # gathered rows
                pltpu.SemaphoreType.DMA((1,)),
            ],
        ),
        compiler_params=pltpu.CompilerParams(
            dimension_semantics=("parallel",)),
    )(ids, emb_table, w_all, b_all, mask, w_fc, b_fc)

    return out_pad[:, :O]


# --------------------------- params & reference ------------------------------
def init_params(key, vocab_size, embedding_dim, n_filters, filter_sizes,
                output_dim, pad_idx):
    n_keys = 3 + 2 * len(filter_sizes)
    keys = jax.random.split(key, n_keys)
    emb = jax.random.normal(keys[0], (vocab_size, embedding_dim), jnp.float32)
    emb = emb.at[pad_idx].set(0.0)                   # nn.Embedding padding_idx row
    conv_w, conv_b = [], []
    for i, fs in enumerate(filter_sizes):
        conv_w.append(0.1 * jax.random.normal(
            keys[1 + 2 * i], (n_filters, fs, embedding_dim), jnp.float32))
        conv_b.append(0.1 * jax.random.normal(
            keys[2 + 2 * i], (n_filters,), jnp.float32))
    fc_w = 0.1 * jax.random.normal(
        keys[-2], (output_dim, len(filter_sizes) * n_filters), jnp.float32)
    fc_b = 0.1 * jax.random.normal(keys[-1], (output_dim,), jnp.float32)
    return dict(embedding=emb, filter_sizes=tuple(filter_sizes),
                conv_w=conv_w, conv_b=conv_b, fc_w=fc_w, fc_b=fc_b)


def cnn_forward_ref(text, params):
    """Pure-JAX reference matching the PyTorch forward (dropout = identity)."""
    emb = jnp.take(params["embedding"], text, axis=0)                # [B, S, E]
    pooled = []
    for fs, w, b in zip(params["filter_sizes"], params["conv_w"], params["conv_b"]):
        B, S, E = emb.shape
        L = S - fs + 1
        acc = jnp.zeros((B, L, w.shape[0]), jnp.float32)
        for i in range(fs):
            acc = acc + jnp.einsum("ble,fe->blf", emb[:, i:i + L, :], w[:, i, :])
        acc = jax.nn.relu(acc + b[None, None, :])
        pooled.append(jnp.max(acc, axis=1))
    cat = jnp.concatenate(pooled, axis=1)
    return cat @ params["fc_w"].T + params["fc_b"][None, :]


# --------------------------------- main --------------------------------------
if __name__ == "__main__":
    vocab_size, embedding_dim = 100, 32
    n_filters, filter_sizes = 8, (2, 3, 4)
    output_dim, dropout, pad_idx = 2, 0.5, 1
    batch, seq_len = 2, 16

    root = jax.random.PRNGKey(0)
    k_params, k_text = jax.random.split(root)
    params = init_params(k_params, vocab_size, embedding_dim, n_filters,
                         filter_sizes, output_dim, pad_idx)
    text = jax.random.randint(k_text, (batch, seq_len), 0, vocab_size, jnp.int32)

    out = cnn_forward(text, params)
    out = jax.block_until_ready(out)

    ref = cnn_forward_ref(text, params)
    assert out.shape == (batch, output_dim)
    assert jnp.allclose(out, ref, rtol=2e-2, atol=2e-2), (out, ref)
    print("KERNEL_OK")
</pallas_src>

<mosaic_0001>
module attributes {stable_mosaic.version = 11 : i64} {
  func.func @_cnn_fused_kernel(%arg0: i32, %arg1: memref<32xi32, #tpu.memory_space<smem>>, %arg2: memref<100x32xf32, #tpu.memory_space<any>>, %arg3: memref<128x128xbf16, #tpu.memory_space<vmem>>, %arg4: memref<1x128xf32, #tpu.memory_space<vmem>>, %arg5: memref<16x128xf32, #tpu.memory_space<vmem>>, %arg6: memref<128x128xbf16, #tpu.memory_space<vmem>>, %arg7: memref<1x128xf32, #tpu.memory_space<vmem>>, %arg8: memref<2x128xf32, #tpu.memory_space<vmem>>, %arg9: memref<32x32xf32, #tpu.memory_space<vmem>>, %arg10: memref<1x!tpu.dma_semaphore, #tpu.memory_space<semaphore_mem>>) attributes {dimension_semantics = [#tpu.dimension_semantics<parallel>], iteration_bounds = array<i64: 1>, scalar_prefetch = 1 : i64, scratch_operands = 2 : i64, tpu.core_type = #tpu.core_type<tc>, window_params = [{}, {pipeline_mode = #tpu.pipeline_mode<synchronous>, transform_indices = @transform_1, window_bounds = array<i64: 128, 128>}, {pipeline_mode = #tpu.pipeline_mode<synchronous>, transform_indices = @transform_2, window_bounds = array<i64: 1, 128>}, {pipeline_mode = #tpu.pipeline_mode<synchronous>, transform_indices = @transform_3, window_bounds = array<i64: 16, 128>}, {pipeline_mode = #tpu.pipeline_mode<synchronous>, transform_indices = @transform_4, window_bounds = array<i64: 128, 128>}, {pipeline_mode = #tpu.pipeline_mode<synchronous>, transform_indices = @transform_5, window_bounds = array<i64: 1, 128>}, {transform_indices = @transform_6, window_bounds = array<i64: 2, 128>}]} {
    %c32_i32 = arith.constant 32 : i32
    %0 = arith.muli %arg0, %c32_i32 : i32
    %c0_i32 = arith.constant 0 : i32
    %c32_i32_0 = arith.constant 32 : i32
    %1 = arith.addi %c0_i32, %c32_i32_0 : i32
    %c1_i32 = arith.constant 1 : i32
    scf.for %arg11 = %c0_i32 to %1 step %c1_i32  : i32 {
      %c1_i32_22 = arith.constant 1 : i32
      %34 = arith.muli %arg11, %c1_i32_22 : i32
      %c0_i32_23 = arith.constant 0 : i32
      %35 = arith.addi %c0_i32_23, %34 : i32
      %36 = arith.addi %0, %35 : i32
      %37 = arith.index_cast %36 : i32 to index
      %38 = memref.load %arg1[%37] : memref<32xi32, #tpu.memory_space<smem>>
      %c0_i32_24 = arith.constant 0 : i32
      %c0_i32_25 = arith.constant 0 : i32
      %39 = tpu.memref_slice %arg2[%38, %c0_i32_25] : memref<100x32xf32, #tpu.memory_space<any>> -> memref<1x32xf32, #tpu.memory_space<any>>
      %40 = tpu.memref_squeeze %39 : memref<1x32xf32, #tpu.memory_space<any>> -> memref<32xf32, #tpu.memory_space<any>>
      %c0_i32_26 = arith.constant 0 : i32
      %41 = tpu.memref_slice %arg9[%35, %c0_i32_26] : memref<32x32xf32, #tpu.memory_space<vmem>> -> memref<1x32xf32, #tpu.memory_space<vmem>>
      %42 = tpu.memref_squeeze %41 : memref<1x32xf32, #tpu.memory_space<vmem>> -> memref<32xf32, #tpu.memory_space<vmem>>
      %43 = tpu.memref_slice %arg10[%c0_i32_24] : memref<1x!tpu.dma_semaphore, #tpu.memory_space<semaphore_mem>> -> memref<1x!tpu.dma_semaphore, #tpu.memory_space<semaphore_mem>>
      %44 = tpu.memref_squeeze %43 : memref<1x!tpu.dma_semaphore, #tpu.memory_space<semaphore_mem>> -> memref<!tpu.dma_semaphore, #tpu.memory_space<semaphore_mem>>
      tpu.enqueue_dma source(%40 : memref<32xf32, #tpu.memory_space<any>>) target(%42 : memref<32xf32, #tpu.memory_space<vmem>>) target_semaphore(%44 : memref<!tpu.dma_semaphore, #tpu.memory_space<semaphore_mem>>)
    }
    %c32_i32_1 = arith.constant 32 : i32
    %c0_i32_2 = arith.constant 0 : i32
    %c32_i32_3 = arith.constant 32 : i32
    %2 = arith.addi %c0_i32_2, %c32_i32_3 : i32
    %c1_i32_4 = arith.constant 1 : i32
    scf.for %arg11 = %c0_i32_2 to %2 step %c1_i32_4  : i32 {
      %c0_i32_22 = arith.constant 0 : i32
      %c0_i32_23 = arith.constant 0 : i32
      %c0_i32_24 = arith.constant 0 : i32
      %c0_i32_25 = arith.constant 0 : i32
      %34 = tpu.memref_slice %arg2[%c0_i32_22, %c0_i32_25] : memref<100x32xf32, #tpu.memory_space<any>> -> memref<1x32xf32, #tpu.memory_space<any>>
      %35 = tpu.memref_squeeze %34 : memref<1x32xf32, #tpu.memory_space<any>> -> memref<32xf32, #tpu.memory_space<any>>
      %c0_i32_26 = arith.constant 0 : i32
      %36 = tpu.memref_slice %arg9[%c0_i32_23, %c0_i32_26] : memref<32x32xf32, #tpu.memory_space<vmem>> -> memref<1x32xf32, #tpu.memory_space<vmem>>
      %37 = tpu.memref_squeeze %36 : memref<1x32xf32, #tpu.memory_space<vmem>> -> memref<32xf32, #tpu.memory_space<vmem>>
      %38 = tpu.memref_slice %arg10[%c0_i32_24] : memref<1x!tpu.dma_semaphore, #tpu.memory_space<semaphore_mem>> -> memref<1x!tpu.dma_semaphore, #tpu.memory_space<semaphore_mem>>
      %39 = tpu.memref_squeeze %38 : memref<1x!tpu.dma_semaphore, #tpu.memory_space<semaphore_mem>> -> memref<!tpu.dma_semaphore, #tpu.memory_space<semaphore_mem>>
      tpu.wait_dma2 semaphore(%39 : memref<!tpu.dma_semaphore, #tpu.memory_space<semaphore_mem>>) src(%35 : memref<32xf32, #tpu.memory_space<any>>) dst(%37 : memref<32xf32, #tpu.memory_space<vmem>>)
    }
    %c0 = arith.constant 0 : index
    %c0_5 = arith.constant 0 : index
    %3 = vector.load %arg9[%c0, %c0_5] : memref<32x32xf32, #tpu.memory_space<vmem>>, vector<32x32xf32>
    %4 = vector.shape_cast %3 : vector<32x32xf32> to vector<2x16x32xf32>
    %cst = arith.constant 0.000000e+00 : f32
    %5 = vector.broadcast %cst : f32 to vector<2x3x32xf32>
    %6 = tpu.concatenate %4, %5 in 1 : vector<2x16x32xf32>, vector<2x3x32xf32> -> vector<2x19x32xf32>
    %7 = vector.extract_strided_slice %6 {offsets = [0, 0, 0], sizes = [2, 16, 32], strides = [1, 1, 1]} : vector<2x19x32xf32> to vector<2x16x32xf32>
    %8 = vector.extract_strided_slice %6 {offsets = [0, 1, 0], sizes = [2, 16, 32], strides = [1, 1, 1]} : vector<2x19x32xf32> to vector<2x16x32xf32>
    %9 = vector.extract_strided_slice %6 {offsets = [0, 2, 0], sizes = [2, 16, 32], strides = [1, 1, 1]} : vector<2x19x32xf32> to vector<2x16x32xf32>
    %10 = vector.extract_strided_slice %6 {offsets = [0, 3, 0], sizes = [2, 16, 32], strides = [1, 1, 1]} : vector<2x19x32xf32> to vector<2x16x32xf32>
    %11 = tpu.concatenate %7, %8, %9, %10 in 2 : vector<2x16x32xf32>, vector<2x16x32xf32>, vector<2x16x32xf32>, vector<2x16x32xf32> -> vector<2x16x128xf32>
    %12 = vector.shape_cast %11 : vector<2x16x128xf32> to vector<32x128xf32>
    %13 = arith.truncf %12 : vector<32x128xf32> to vector<32x128xbf16>
    %c0_6 = arith.constant 0 : index
    %c0_7 = arith.constant 0 : index
    %14 = vector.load %arg3[%c0_6, %c0_7] : memref<128x128xbf16, #tpu.memory_space<vmem>>, vector<128x128xbf16>
    %cst_8 = arith.constant dense<0.000000e+00> : vector<32x128xf32>
    %15 = tpu.matmul %13, %14, %cst_8 {dimension_numbers = #tpu.dot_dimension_numbers<[1], [0], [0], [1], [0, 0, 1, 1], [], []>} : vector<32x128xbf16>, vector<128x128xbf16>, vector<32x128xf32> -> vector<32x128xf32>
    %c0_9 = arith.constant 0 : index
    %c0_10 = arith.constant 0 : index
    %16 = vector.load %arg4[%c0_9, %c0_10] : memref<1x128xf32, #tpu.memory_space<vmem>>, vector<1x128xf32>
    %17 = vector.broadcast %16 : vector<1x128xf32> to vector<32x128xf32>
    %18 = arith.addf %15, %17 : vector<32x128xf32>
    %cst_11 = arith.constant 0.000000e+00 : f32
    %19 = vector.broadcast %cst_11 : f32 to vector<32x128xf32>
    %20 = arith.maximumf %18, %19 : vector<32x128xf32>
    %21 = vector.shape_cast %20 : vector<32x128xf32> to vector<2x16x128xf32>
    %c0_12 = arith.constant 0 : index
    %c0_13 = arith.constant 0 : index
    %22 = vector.load %arg5[%c0_12, %c0_13] : memref<16x128xf32, #tpu.memory_space<vmem>>, vector<16x128xf32>
    %23 = vector.shape_cast %22 : vector<16x128xf32> to vector<1x16x128xf32>
    %24 = vector.broadcast %23 : vector<1x16x128xf32> to vector<2x16x128xf32>
    %25 = arith.addf %21, %24 : vector<2x16x128xf32>
    %cst_14 = arith.constant dense<0xFF800000> : vector<2x128xf32>
    %26 = vector.multi_reduction <maximumf>, %25, %cst_14 [1] : vector<2x16x128xf32> to vector<2x128xf32>
    %27 = arith.truncf %26 : vector<2x128xf32> to vector<2x128xbf16>
    %c0_15 = arith.constant 0 : index
    %c0_16 = arith.constant 0 : index
    %28 = vector.load %arg6[%c0_15, %c0_16] : memref<128x128xbf16, #tpu.memory_space<vmem>>, vector<128x128xbf16>
    %cst_17 = arith.constant dense<0.000000e+00> : vector<2x128xf32>
    %29 = tpu.matmul %27, %28, %cst_17 {dimension_numbers = #tpu.dot_dimension_numbers<[1], [0], [0], [1], [0, 0, 1, 1], [], []>} : vector<2x128xbf16>, vector<128x128xbf16>, vector<2x128xf32> -> vector<2x128xf32>
    %c0_18 = arith.constant 0 : index
    %c0_19 = arith.constant 0 : index
    %30 = vector.load %arg7[%c0_18, %c0_19] : memref<1x128xf32, #tpu.memory_space<vmem>>, vector<1x128xf32>
    %31 = vector.broadcast %30 : vector<1x128xf32> to vector<2x128xf32>
    %32 = arith.addf %29, %31 : vector<2x128xf32>
    %c0_20 = arith.constant 0 : index
    %c0_21 = arith.constant 0 : index
    %33 = vector.load %arg8[%c0_20, %c0_21] : memref<2x128xf32, #tpu.memory_space<vmem>>, vector<2x128xf32>
    tpu.vector_store %arg8[%c0_20, %c0_21], %32 {strides = array<i32>} : memref<2x128xf32, #tpu.memory_space<vmem>>, vector<2x128xf32>,
    return
  }
  func.func @transform_1(%arg0: i32, %arg1: memref<32xi32, #tpu.memory_space<smem>>) -> (i32, i32) {
    %c0_i32 = arith.constant 0 : i32
    %c0_i32_0 = arith.constant 0 : i32
    %c0_i32_1 = arith.constant 0 : i32
    return %c0_i32, %c0_i32_0 : i32, i32
  }
  func.func @transform_2(%arg0: i32, %arg1: memref<32xi32, #tpu.memory_space<smem>>) -> (i32, i32) {
    %c0_i32 = arith.constant 0 : i32
    %c0_i32_0 = arith.constant 0 : i32
    %c0_i32_1 = arith.constant 0 : i32
    return %c0_i32, %c0_i32_0 : i32, i32
  }
  func.func @transform_3(%arg0: i32, %arg1: memref<32xi32, #tpu.memory_space<smem>>) -> (i32, i32) {
    %c0_i32 = arith.constant 0 : i32
    %c0_i32_0 = arith.constant 0 : i32
    %c0_i32_1 = arith.constant 0 : i32
    return %c0_i32, %c0_i32_0 : i32, i32
  }
  func.func @transform_4(%arg0: i32, %arg1: memref<32xi32, #tpu.memory_space<smem>>) -> (i32, i32) {
    %c0_i32 = arith.constant 0 : i32
    %c0_i32_0 = arith.constant 0 : i32
    %c0_i32_1 = arith.constant 0 : i32
    return %c0_i32, %c0_i32_0 : i32, i32
  }
  func.func @transform_5(%arg0: i32, %arg1: memref<32xi32, #tpu.memory_space<smem>>) -> (i32, i32) {
    %c0_i32 = arith.constant 0 : i32
    %c0_i32_0 = arith.constant 0 : i32
    %c0_i32_1 = arith.constant 0 : i32
    return %c0_i32, %c0_i32_0 : i32, i32
  }
  func.func @transform_6(%arg0: i32, %arg1: memref<32xi32, #tpu.memory_space<smem>>) -> (i32, i32) {
    %c0_i32 = arith.constant 0 : i32
    %c0_i32_0 = arith.constant 0 : i32
    return %arg0, %c0_i32 : i32, i32
  }
}

</mosaic_0001>

<llo_original>
// kernel: tpu_custom_call.1
$region0: #{tpu_custom_call.1}
  #allocation0 [shape = 'u32[]', space=smem, size = 0x4, offset = 0x4, fixed_abs, tag = 'smem constant byte address 0x4 - core index']
  #allocation1 [shape = 'u32[72,128]{1,0:T(1,128)}', space=vmem, size = 0x9000, scoped, tag = 'internal scratch']
  #allocation2 [shape = 'f32[32,32]{1,0:T(8,128)}', space=vmem, size = 0x4000, scoped, tag = 'scratch operand']
  #allocation3 [shape = 's32[1]{0}', space=sflag, size = 0x4, scoped, tag = 'scratch operand']
  #allocation4 [shape = 's32[1]{0}', space=sflag, size = 0x4, scoped, tag = 'scoped memory for tpu_custom_call.1']
  #allocation5 [shape = 'u8[512]{0}', space=smem, size = 0x200, scoped, tag = 'prefetched SMEM operand 0']
  #allocation10 [shape = 's32[]', space=sflag, size = 0x4, offset = 0, fixed_abs, tag = 'sflag constant byte address 0x0 - dummy sync flag']
  %s0 = inlined_call_operand.vmem [shape: s32[32], index: 0, kind: input, shape index: {}]
  %s1 = inlined_call_operand.vmem [shape: f32[100,32], index: 1, kind: input, shape index: {}]
  %s2 = inlined_call_operand.vmem [shape: bf16[128,128], index: 2, kind: input, shape index: {}]
  %s3 = inlined_call_operand.vmem [shape: f32[1,128], index: 3, kind: input, shape index: {}]
  %s4 = inlined_call_operand.hbm [shape: f32[16,128], index: 4, kind: input, shape index: {}]
  %s5 = inlined_call_operand.vmem [shape: bf16[128,128], index: 5, kind: input, shape index: {}]
  %s6 = inlined_call_operand.vmem [shape: f32[1,128], index: 6, kind: input, shape index: {}]
  %s7 = inlined_call_operand.hbm [shape: f32[2,128], index: 7, kind: output, shape index: {}]
  %s8 = sld [smem:[#allocation0]]
  $region78: #{tpu_custom_call.1} parent=0
    _
  %s10 = ssub.s32 1, %s8
  %s11 = scalar_select 0, %s10, %s8
  %s13 = sshll.u32 %s0, 4
  %s14 = int_to_ptr.vmem [resolvable:$true] %s13
  %16 = dma.vmem_to_smem %s14, 16, [#allocation5], [#allocation4]
  %18 = dma.done [#allocation4], 16
  %19 = sfence
  $region1: #{tpu_custom_call.1} parent=0
    #allocation6 [shape = 'u8[8192]{0}', space=vmem, size = 0x2000, scoped, tag = 'input window, operand 4, single buffered']
    #allocation7 [shape = 's32[1]{0}', space=sflag, size = 0x4, scoped, tag = 'scoped memory for tpu_custom_call.1']
    #allocation8 [shape = 's32[1]{0}', space=sflag, size = 0x4, scoped, tag = 'scoped memory for tpu_custom_call.1']
    #allocation9 [shape = 'u8[1024]{0}', space=vmem, size = 0x400, scoped, tag = 'output window, operand 0, single buffered']
    %20 = vsyncpa [#allocation7], 0
    %21 = vsyncpa [#allocation8], 0
    // Predicated region
    $region2: #{tpu_custom_call.1} parent=1 // pred_check
      _
    $region3: #{tpu_custom_call.1} parent=1 // pred_check_branch
      %23 = sbr.rel (0) target = $region5
    $region4: #{tpu_custom_call.1} parent=1 // pred_region
      _
    $region5: #{tpu_custom_call.1} parent=1 // pred_fallthru
      _
    // Predicated region
    $region6: #{tpu_custom_call.1} parent=1 // pred_check
      _
    $region7: #{tpu_custom_call.1} parent=1 // pred_check_branch
      %25 = sbr.rel (0) target = $region9
    $region8: #{tpu_custom_call.1} parent=1 // pred_region
      _
    $region9: #{tpu_custom_call.1} parent=1 // pred_fallthru
      _
    // Predicated region
    $region10: #{tpu_custom_call.1} parent=1 // pred_check
      _
    $region11: #{tpu_custom_call.1} parent=1 // pred_check_branch
      %27 = sbr.rel (0) target = $region13
    $region12: #{tpu_custom_call.1} parent=1 // pred_region
      %29 = vsyncadd [#allocation7], 0
      %s30 = sshll.u32 %s4, 4
      %s31 = int_to_ptr.hbm [resolvable:$true] %s30
      %s32 = sshll.u32 [#allocation6], 4
      %s33 = int_to_ptr.vmem [resolvable:$true] %s32
      %38 = dma.hbm_to_vmem [thread:$0]  %s31, 256, %s33, [#allocation7], 128, 128, 8
    $region13: #{tpu_custom_call.1} parent=1 // pred_fallthru
      _
    // Predicated region
    $region14: #{tpu_custom_call.1} parent=1 // pred_check
      _
    $region15: #{tpu_custom_call.1} parent=1 // pred_check_branch
      %40 = sbr.rel (0) target = $region17
    $region16: #{tpu_custom_call.1} parent=1 // pred_region
      _
    $region17: #{tpu_custom_call.1} parent=1 // pred_fallthru
      _
    // Predicated region
    $region18: #{tpu_custom_call.1} parent=1 // pred_check
      _
    $region19: #{tpu_custom_call.1} parent=1 // pred_check_branch
      %42 = sbr.rel (0) target = $region21
    $region20: #{tpu_custom_call.1} parent=1 // pred_region
      _
    $region21: #{tpu_custom_call.1} parent=1 // pred_fallthru
      _
    // Predicated region
    $region22: #{tpu_custom_call.1} parent=1 // pred_check
      _
    $region23: #{tpu_custom_call.1} parent=1 // pred_check_branch
      %44 = sbr.rel (0) target = $region25
    $region24: #{tpu_custom_call.1} parent=1 // pred_region
      %46 = dma.done [#allocation7], 256
    $region25: #{tpu_custom_call.1} parent=1 // pred_fallthru
      _
    %s47 = smul.u32 0, 32
    loop: start=0, step=1, limit=32
    $region26: #{tpu_custom_call.1} parent=1 // loop_pre_header
      _
    $region27: #{tpu_custom_call.1} parent=1 // loop_header
      %s49 = sphi 0, %s53
      %p50 = scmp.ge.s32.totalorder %s49, 32
    $region28: #{tpu_custom_call.1} parent=1 // loop_header_branch
      %52 = sbr.rel (%p50) target = $region32
    $region29: #{tpu_custom_call.1} parent=1 // loop_body
      %s54 = sadd.s32 %s47, %s49
      %s55 = sld [smem:[#allocation5 + %s54]]
      %s56 = scalar_lea.vmem %s1, %s55
      %s57 = scalar_lea.vmem [#allocation2], %s49
      // Predicated region
      $region33: #{tpu_custom_call.1} parent=29 // pred_check
        _
      $region34: #{tpu_custom_call.1} parent=29 // pred_check_branch
        %59 = sbr.rel target = $region36
      $region35: #{tpu_custom_call.1} parent=29 // pred_region
        // Predicated region
        $region48: #{tpu_custom_call.1} parent=35 // pred_check
          _
        $region49: #{tpu_custom_call.1} parent=35 // pred_check_branch
          %75 = sbr.rel (0) target = $region51
        $region50: #{tpu_custom_call.1} parent=35 // pred_region
          %s77 = ssub.s32 2, 1
          loop: start=0, step=1, limit=1
          $region52: #{tpu_custom_call.1} parent=50 // loop_pre_header
            _
          $region53: #{tpu_custom_call.1} parent=50 // loop_header
            %s79 = sphi 0, %s83
            %p80 = scmp.ge.s32.totalorder %s79, 1
            %s84 = sphi %s56, %s56
            %s85 = sphi %s57, %s57
          $region54: #{tpu_custom_call.1} parent=50 // loop_header_branch
            %82 = sbr.rel (%p80) target = $region58
          $region55: #{tpu_custom_call.1} parent=50 // loop_body
            %v86 = vld [vmem:[%s84] sm:%s77]
            %87 = vst [vmem:[%s85] sm:%s77] %v86
          $region56: #{tpu_custom_call.1} parent=50 // loop_footer
            %s83 = sadd.s32 1, %s79
          $region57: #{tpu_custom_call.1} parent=50 // loop_footer_branch
            %78 = sbr.rel target = $region53
          $region58: #{tpu_custom_call.1} parent=50 // loop_exit
            _
        $region51: #{tpu_custom_call.1} parent=35 // pred_fallthru
          _
      $region36: #{tpu_custom_call.1} parent=29 // pred_fallthru
        _
      // Predicated region
      $region37: #{tpu_custom_call.1} parent=29 // pred_check
        _
      $region38: #{tpu_custom_call.1} parent=29 // pred_check_branch
        %61 = sbr.rel (0) target = $region40
      $region39: #{tpu_custom_call.1} parent=29 // pred_region
        %s63 = ssub.s32 2, 1
        loop: start=0, step=1, limit=1
        $region41: #{tpu_custom_call.1} parent=39 // loop_pre_header
          _
        $region42: #{tpu_custom_call.1} parent=39 // loop_header
          %s65 = sphi 0, %s69
          %p66 = scmp.ge.s32.totalorder %s65, 1
          %s70 = sphi %s56, %s56
          %s71 = sphi %s57, %s57
        $region43: #{tpu_custom_call.1} parent=39 // loop_header_branch
          %68 = sbr.rel (%p66) target = $region47
        $region44: #{tpu_custom_call.1} parent=39 // loop_body
          %v72 = vld [vmem:[%s70] sm:%s63]
          %73 = vst [vmem:[%s71] sm:%s63] %v72
        $region45: #{tpu_custom_call.1} parent=39 // loop_footer
          %s69 = sadd.s32 1, %s65
        $region46: #{tpu_custom_call.1} parent=39 // loop_footer_branch
          %64 = sbr.rel target = $region42
        $region47: #{tpu_custom_call.1} parent=39 // loop_exit
          _
      $region40: #{tpu_custom_call.1} parent=29 // pred_fallthru
        _
      // Predicated region
      $region59: #{tpu_custom_call.1} parent=29 // pred_check
        _
      $region60: #{tpu_custom_call.1} parent=29 // pred_check_branch
        %90 = sbr.rel (0) target = $region62
      $region61: #{tpu_custom_call.1} parent=29 // pred_region
        %91 = vsyncadd [#allocation3], 16
      $region62: #{tpu_custom_call.1} parent=29 // pred_fallthru
        _
    $region30: #{tpu_custom_call.1} parent=1 // loop_footer
      %s53 = sadd.s32 1, %s49
    $region31: #{tpu_custom_call.1} parent=1 // loop_footer_branch
      %48 = sbr.rel target = $region27
    $region32: #{tpu_custom_call.1} parent=1 // loop_exit
      _
    loop: start=0, step=1, limit=32
    $region63: #{tpu_custom_call.1} parent=1 // loop_pre_header
      _
    $region64: #{tpu_custom_call.1} parent=1 // loop_header
      %s93 = sphi 0, %s97
      %p94 = scmp.ge.s32.totalorder %s93, 32
    $region65: #{tpu_custom_call.1} parent=1 // loop_header_branch
      %96 = sbr.rel (%p94) target = $region69
    $region66: #{tpu_custom_call.1} parent=1 // loop_body
      %99 = dma.done [#allocation3], 16
    $region67: #{tpu_custom_call.1} parent=1 // loop_footer
      %s97 = sadd.s32 1, %s93
    $region68: #{tpu_custom_call.1} parent=1 // loop_footer_branch
      %92 = sbr.rel target = $region64
    $region69: #{tpu_custom_call.1} parent=1 // loop_exit
      _
    %v100 = vld [vmem:[#allocation2] sm:$0xff]
    %v101 = vld [vmem:[#allocation2 + $0x8] sm:$0xff]
    %v102 = vld [vmem:[#allocation2 + $0x10] sm:$0xff]
    %v103 = vld [vmem:[#allocation2 + $0x18] sm:$0xff]
    %vm109 = vcmask 1046528
    %v110 = vrot.slane %v100, 1
    %v111 = vrot.slane %v101, 1
    %v112 = vsel %vm109, %v110, %v111
    %v113 = vrot.slane 0.0, 1
    %v114 = vsel %vm109, %v111, %v113
    %v115 = vrot.slane %v102, 1
    %v116 = vrot.slane %v103, 1
    %v117 = vsel %vm109, %v115, %v116
    %v118 = vsel %vm109, %v116, %v113
    %119 = vrot.lane.b32.xlu0 %v112, 32
    %v120 = vpop.permute.xlu0 %119
    %121 = vrot.lane.b32.xlu0 %v114, 32
    %v122 = vpop.permute.xlu0 %121
    %123 = vrot.lane.b32.xlu0 %v117, 32
    %v124 = vpop.permute.xlu0 %123
    %125 = vrot.lane.b32.xlu0 %v118, 32
    %v126 = vpop.permute.xlu0 %125
    %vm131 = vcmask 1045504
    %v132 = vrot.slane %v100, 2
    %v133 = vrot.slane %v101, 2
    %v134 = vsel %vm131, %v132, %v133
    %v135 = vrot.slane 0.0, 2
    %v136 = vsel %vm131, %v133, %v135
    %v137 = vrot.slane %v102, 2
    %v138 = vrot.slane %v103, 2
    %v139 = vsel %vm131, %v137, %v138
    %v140 = vsel %vm131, %v138, %v135
    %141 = vrot.lane.b32.xlu0 %v134, 64
    %v142 = vpop.permute.xlu0 %141
    %143 = vrot.lane.b32.xlu0 %v136, 64
    %v144 = vpop.permute.xlu0 %143
    %145 = vrot.lane.b32.xlu0 %v139, 64
    %v146 = vpop.permute.xlu0 %145
    %147 = vrot.lane.b32.xlu0 %v140, 64
    %v148 = vpop.permute.xlu0 %147
    %vm153 = vcmask 1044480
    %v154 = vrot.slane %v100, 3
    %v155 = vrot.slane %v101, 3
    %v156 = vsel %vm153, %v154, %v155
    %v157 = vrot.slane 0.0, 3
    %v158 = vsel %vm153, %v155, %v157
    %v159 = vrot.slane %v102, 3
    %v160 = vrot.slane %v103, 3
    %v161 = vsel %vm153, %v159, %v160
    %v162 = vsel %vm153, %v160, %v157
    %163 = vrot.lane.b32.xlu0 %v156, 96
    %v164 = vpop.permute.xlu0 %163
    %165 = vrot.lane.b32.xlu0 %v158, 96
    %v166 = vpop.permute.xlu0 %165
    %167 = vrot.lane.b32.xlu0 %v161, 96
    %v168 = vpop.permute.xlu0 %167
    %169 = vrot.lane.b32.xlu0 %v162, 96
    %v170 = vpop.permute.xlu0 %169
    %vm175 = vcmask 261120
    %v176 = vsel %vm175, %v100, %v120
    %v177 = vsel %vm175, %v101, %v122
    %v178 = vsel %vm175, %v102, %v124
    %v179 = vsel %vm175, %v103, %v126
    %vm180 = vcmask 523264
    %v181 = vsel %vm180, %v176, %v142
    %v182 = vsel %vm180, %v177, %v144
    %v183 = vsel %vm180, %v178, %v146
    %v184 = vsel %vm180, %v179, %v148
    %vm185 = vcmask 785408
    %v186 = vsel %vm185, %v181, %v164
    %v187 = vsel %vm185, %v182, %v166
    %v188 = vsel %vm185, %v183, %v168
    %v189 = vsel %vm185, %v184, %v170
    %v190 = vpack.c.bf16 %v187, %v186
    %v191 = vpack.c.bf16 %v189, %v188
    %v192 = vld [vmem:[%s2] sm:$0xf]
    %v193 = vld [vmem:[%s2 + $0x4] sm:$0xf]
    %v194 = vld [vmem:[%s2 + $0x8] sm:$0xf]
    %v195 = vld [vmem:[%s2 + $0xc] sm:$0xf]
    %v196 = vld [vmem:[%s2 + $0x10] sm:$0xf]
    %v197 = vld [vmem:[%s2 + $0x14] sm:$0xf]
    %v198 = vld [vmem:[%s2 + $0x18] sm:$0xf]
    %v199 = vld [vmem:[%s2 + $0x1c] sm:$0xf]
    %v200 = vld [vmem:[%s2 + $0x20] sm:$0xf]
    %v201 = vld [vmem:[%s2 + $0x24] sm:$0xf]
    %v202 = vld [vmem:[%s2 + $0x28] sm:$0xf]
    %v203 = vld [vmem:[%s2 + $0x2c] sm:$0xf]
    %v204 = vld [vmem:[%s2 + $0x30] sm:$0xf]
    %v205 = vld [vmem:[%s2 + $0x34] sm:$0xf]
    %v206 = vld [vmem:[%s2 + $0x38] sm:$0xf]
    %v207 = vld [vmem:[%s2 + $0x3c] sm:$0xf]
    %v208 = vld [vmem:[%s3] sm:$0x1]
    %v210 = vperm.slane %v208, 0
    %v228 = vunpack.c.l.b16 %v192
    %v229 = vunpack.c.l.b16 %v193
    %v230 = vunpack.c.l.b16 %v194
    %v231 = vunpack.c.l.b16 %v195
    %v232 = vunpack.c.l.b16 %v196
    %v233 = vunpack.c.l.b16 %v197
    %v234 = vunpack.c.l.b16 %v198
    %v235 = vunpack.c.l.b16 %v199
    %v236 = vunpack.c.l.b16 %v200
    %v237 = vunpack.c.l.b16 %v201
    %v238 = vunpack.c.l.b16 %v202
    %v239 = vunpack.c.l.b16 %v203
    %v240 = vunpack.c.l.b16 %v204
    %v241 = vunpack.c.l.b16 %v205
    %v242 = vunpack.c.l.b16 %v206
    %v243 = vunpack.c.l.b16 %v207
    %v244 = vpack.c.b16 %v229, %v228
    %v245 = vpack.c.b16 %v231, %v230
    %v246 = vpack.c.b16 %v233, %v232
    %v247 = vpack.c.b16 %v235, %v234
    %v248 = vpack.c.b16 %v237, %v236
    %v249 = vpack.c.b16 %v239, %v238
    %v250 = vpack.c.b16 %v241, %v240
    %v251 = vpack.c.b16 %v243, %v242
    %260 = vmatpush.bf16.msra.mxu0 %v251
    %261 = vmatpush.bf16.msra.mxu0 %v250
    %262 = vmatpush.bf16.msra.mxu0 %v249
    %263 = vmatpush.bf16.msra.mxu0 %v248
    %264 = vmatpush.bf16.msra.mxu0 %v247
    %265 = vmatpush.bf16.msra.mxu0 %v246
    %266 = vmatpush.bf16.msra.mxu0 %v245
    %267 = vmatpush.bf16.msra.mxu0 %v244
    %268 = vmatmul.bf16.gmra.mxu0 %v190
    %v269 = vpop.f32.mrf.mxu0
    %v270 = vadd.f32 %v210, %v269
    %v271 = vpop.f32.mrf.mxu0
    %v272 = vadd.f32 %v210, %v271
    %273 = vmatmul.bf16.gmra.mxu0 %v191
    %v274 = vpop.f32.mrf.mxu0
    %v275 = vadd.f32 %v210, %v274
    %v276 = vpop.f32.mrf.mxu0
    %v277 = vadd.f32 %v210, %v276
    %278 = vdwg.mxu0
    %v279 = vmax.f32 %v270, 0.0
    %v280 = vmax.f32 %v272, 0.0
    %v281 = vmax.f32 %v275, 0.0
    %v282 = vmax.f32 %v277, 0.0
    %v283 = vld [vmem:[#allocation6] sm:$0xff]
    %v284 = vld [vmem:[#allocation6 + $0x8] sm:$0xff]
    %v285 = vadd.f32 %v279, %v283
    %v286 = vadd.f32 %v280, %v284
    %v287 = vadd.f32 %v281, %v283
    %v288 = vadd.f32 %v282, %v284
    %v289 = vmax.f32 %v285, %v286
    %v290 = vrot.slane %v289, 4
    %v291 = vmax.f32 %v289, %v290
    %v292 = vrot.slane %v291, 2
    %v293 = vmax.f32 %v291, %v292
    %v294 = vrot.slane %v293, 1
    %v295 = vmax.f32 %v293, %v294
    %v296 = vmax.f32 %v287, %v288
    %v297 = vrot.slane %v296, 4
    %v298 = vmax.f32 %v296, %v297
    %v299 = vrot.slane %v298, 2
    %v300 = vmax.f32 %v298, %v299
    %v301 = vrot.slane %v300, 1
    %v302 = vmax.f32 %v300, %v301
    %v303 = vpack.c.bf16 %v295, %v295
    %v304 = vpack.c.bf16 %v302, %v302
    %v305 = vld [vmem:[%s5] sm:$0xf]
    %v306 = vld [vmem:[%s5 + $0x4] sm:$0xf]
    %v307 = vld [vmem:[%s5 + $0x8] sm:$0xf]
    %v308 = vld [vmem:[%s5 + $0xc] sm:$0xf]
    %v309 = vld [vmem:[%s5 + $0x10] sm:$0xf]
    %v310 = vld [vmem:[%s5 + $0x14] sm:$0xf]
    %v311 = vld [vmem:[%s5 + $0x18] sm:$0xf]
    %v312 = vld [vmem:[%s5 + $0x1c] sm:$0xf]
    %v313 = vld [vmem:[%s5 + $0x20] sm:$0xf]
    %v314 = vld [vmem:[%s5 + $0x24] sm:$0xf]
    %v315 = vld [vmem:[%s5 + $0x28] sm:$0xf]
    %v316 = vld [vmem:[%s5 + $0x2c] sm:$0xf]
    %v317 = vld [vmem:[%s5 + $0x30] sm:$0xf]
    %v318 = vld [vmem:[%s5 + $0x34] sm:$0xf]
    %v319 = vld [vmem:[%s5 + $0x38] sm:$0xf]
    %v320 = vld [vmem:[%s5 + $0x3c] sm:$0xf]
    %v321 = vld [vmem:[%s6] sm:$0x1]
    %v323 = vperm.slane %v321, 0
    %v327 = vunpack.c.l.b16 %v303
    %v328 = vunpack.c.l.b16 %v304
    %vm329 = vcmask 1041409
    %v330 = vsel %vm329, %v328, %v327
    %v331 = vpack.c.b16 %v330, %v330
    %v349 = vunpack.c.l.b16 %v305
    %v350 = vunpack.c.l.b16 %v306
    %v351 = vunpack.c.l.b16 %v307
    %v352 = vunpack.c.l.b16 %v308
    %v353 = vunpack.c.l.b16 %v309
    %v354 = vunpack.c.l.b16 %v310
    %v355 = vunpack.c.l.b16 %v311
    %v356 = vunpack.c.l.b16 %v312
    %v357 = vunpack.c.l.b16 %v313
    %v358 = vunpack.c.l.b16 %v314
    %v359 = vunpack.c.l.b16 %v315
    %v360 = vunpack.c.l.b16 %v316
    %v361 = vunpack.c.l.b16 %v317
    %v362 = vunpack.c.l.b16 %v318
    %v363 = vunpack.c.l.b16 %v319
    %v364 = vunpack.c.l.b16 %v320
    %v365 = vpack.c.b16 %v350, %v349
    %v366 = vpack.c.b16 %v352, %v351
    %v367 = vpack.c.b16 %v354, %v353
    %v368 = vpack.c.b16 %v356, %v355
    %v369 = vpack.c.b16 %v358, %v357
    %v370 = vpack.c.b16 %v360, %v359
    %v371 = vpack.c.b16 %v362, %v361
    %v372 = vpack.c.b16 %v364, %v363
    %381 = vmatpush.bf16.msra.mxu0 %v372
    %382 = vmatpush.bf16.msra.mxu0 %v371
    %383 = vmatpush.bf16.msra.mxu0 %v370
    %384 = vmatpush.bf16.msra.mxu0 %v369
    %385 = vmatpush.bf16.msra.mxu0 %v368
    %386 = vmatpush.bf16.msra.mxu0 %v367
    %387 = vmatpush.bf16.msra.mxu0 %v366
    %388 = vmatpush.bf16.msra.mxu0 %v365
    %389 = vmatmul.bf16.gmra.mxu0 %v331
    %v390 = vpop.f32.mrf.mxu0
    %v391 = vadd.f32 %v323, %v390
    %v392 = vpop.f32.mrf.mxu0
    %393 = vdwg.mxu0
    %394 = vst [vmem:[#allocation9] sm:$0x3] %v391
    // Predicated region
    $region70: #{tpu_custom_call.1} parent=1 // pred_check
      _
    $region71: #{tpu_custom_call.1} parent=1 // pred_check_branch
      %396 = sbr.rel (0) target = $region73
    $region72: #{tpu_custom_call.1} parent=1 // pred_region
      %398 = vsyncadd [#allocation8], 0
      %s400 = sshll.u32 [#allocation9], 4
      %s401 = int_to_ptr.vmem [resolvable:$true] %s400
      %s402 = sshll.u32 %s7, 4
      %s403 = int_to_ptr.hbm [resolvable:$true] %s402
      %405 = dma.vmem_to_hbm [thread:$0]  %s401, 32, %s403, [#allocation8]
    $region73: #{tpu_custom_call.1} parent=1 // pred_fallthru
      _
    // Predicated region
    $region74: #{tpu_custom_call.1} parent=1 // pred_check
      _
    $region75: #{tpu_custom_call.1} parent=1 // pred_check_branch
      %407 = sbr.rel (0) target = $region77
    $region76: #{tpu_custom_call.1} parent=1 // pred_region
      %409 = dma.done [#allocation8], 32
    $region77: #{tpu_custom_call.1} parent=1 // pred_fallthru
      _
    %410 = vsyncpa [#allocation7], 1
    %411 = vsyncpa [#allocation8], 1
  %412 = vsyncmov [#allocation3]
  %s413 = vpop.sfrf %412
  %p414 = scmp.eq.s32.totalorder %s413, 0
  %p415 = pneg %p414
  %417 = shalt.err (%p415)

</llo_original>
